<compile_context>
chip_gen: v6e
topology: v6e:2x2x1
jax: 0.10.0
libtpu: 0.0.40
codegen_flags: <defaults>
</compile_context>

<pallas_src>
import functools

import jax
import jax.numpy as jnp
from jax.experimental import pallas as pl
from jax.experimental.pallas import tpu as pltpu


def _gumbel_adj_kernel(la_ref, u_ref, out_ref):
    # Batch-independent threshold, computed once per grid step on a tiny
    # (1, num_vars*num_vars) tile. Hard sample = 1  iff  u > 1 - sigmoid(log_alpha).
    thresh = 1.0 - jax.nn.sigmoid(la_ref[...])              # (1, nvv) f32
    out_ref[...] = (u_ref[...] > thresh).astype(out_ref.dtype)


def _pick_batch_block(bs, nvv):
    # Each batch row of a block holds u (4 B) + out (4 B), double-buffered by
    # the pipeline -> ~16 B/elem. Keep one block well inside the scoped-VMEM
    # budget (safe for v5e/v6e 128 MiB and v7x 64 MiB VMEM).
    budget_bytes = 8 * 1024 * 1024
    rows = max(1, budget_bytes // max(1, nvv * 16))
    if rows >= bs:
        return bs                        # whole batch in a single grid step
    return max(8, (rows // 8) * 8)       # keep sublane (second-minor) dim %8


@functools.partial(jax.jit, static_argnames=("bs", "tau"))
def gumbel_adjacency_forward(log_alpha, key, bs, tau=1.0):
    """Forward value of GumbelAdjacency.forward(bs, tau, drawhard=True):
    a (bs, num_vars, num_vars) hard binary adjacency mask."""
    del tau  # tau > 0 does not change the hard forward value (only gradients).
    num_vars = log_alpha.shape[0]
    nvv = num_vars * num_vars

    la_flat = log_alpha.reshape(1, nvv).astype(jnp.float32)
    # Uniform[0, 1) samples, same role as torch.distributions.Uniform(0,1).sample().
    u = jax.random.uniform(key, (bs, nvv), dtype=jnp.float32)

    tb = _pick_batch_block(bs, nvv)
    n_blocks = pl.cdiv(bs, tb)
    bs_pad = n_blocks * tb
    if bs_pad != bs:
        u = jnp.pad(u, ((0, bs_pad - bs), (0, 0)))

    out_flat = pl.pallas_call(
        _gumbel_adj_kernel,
        out_shape=jax.ShapeDtypeStruct((bs_pad, nvv), jnp.float32),
        grid=(n_blocks,),
        in_specs=[
            pl.BlockSpec((1, nvv), lambda b: (0, 0)),    # log_alpha (resident)
            pl.BlockSpec((tb, nvv), lambda b: (b, 0)),   # uniforms, lane-dense
        ],
        out_specs=pl.BlockSpec((tb, nvv), lambda b: (b, 0)),
        compiler_params=pltpu.CompilerParams(
            dimension_semantics=("parallel",),           # independent batch blocks
        ),
    )(la_flat, u)

    return out_flat[:bs].reshape(bs, num_vars, num_vars)


if __name__ == "__main__":
    num_vars = 16
    bs = 2
    tau = 1.0

    # Deterministic parameter init, matching reset_parameters(): constant 5.0
    log_alpha = jnp.full((num_vars, num_vars), 5.0, dtype=jnp.float32)

    # Deterministic randomness
    key = jax.random.PRNGKey(0)

    adj = gumbel_adjacency_forward(log_alpha, key, bs, tau=tau)
    adj = jax.block_until_ready(adj)

    assert adj.shape == (bs, num_vars, num_vars)
    assert adj.dtype == jnp.float32
    # Hard mask: values must be exactly 0.0 or 1.0.
    assert bool(jnp.all((adj == 0.0) | (adj == 1.0)))
    # With log_alpha = 5, P(one) = sigmoid(5) ~= 0.993 -> overwhelmingly ones.
    assert float(jnp.mean(adj)) > 0.9

    print("KERNEL_OK")
</pallas_src>

<mosaic_0001>
module attributes {stable_mosaic.version = 11 : i64} {
  func.func @_gumbel_adj_kernel(%arg0: i32, %arg1: memref<1x256xf32, #tpu.memory_space<vmem>>, %arg2: memref<2x256xf32, #tpu.memory_space<vmem>>, %arg3: memref<2x256xf32, #tpu.memory_space<vmem>>) attributes {dimension_semantics = [#tpu.dimension_semantics<parallel>], iteration_bounds = array<i64: 1>, scalar_prefetch = 0 : i64, scratch_operands = 0 : i64, tpu.core_type = #tpu.core_type<tc>, window_params = [{pipeline_mode = #tpu.pipeline_mode<synchronous>, transform_indices = @transform_0, window_bounds = array<i64: 1, 256>}, {transform_indices = @transform_1, window_bounds = array<i64: 2, 256>}, {transform_indices = @transform_2, window_bounds = array<i64: 2, 256>}]} {
    %c0 = arith.constant 0 : index
    %c0_0 = arith.constant 0 : index
    %0 = vector.load %arg1[%c0, %c0_0] : memref<1x256xf32, #tpu.memory_space<vmem>>, vector<1x256xf32>
    %1 = arith.negf %0 : vector<1x256xf32>
    %2 = math.exp %1 : vector<1x256xf32>
    %cst = arith.constant 1.000000e+00 : f32
    %3 = vector.broadcast %cst : f32 to vector<1x256xf32>
    %4 = arith.addf %3, %2 : vector<1x256xf32>
    %5 = arith.divf %3, %4 : vector<1x256xf32>
    %cst_1 = arith.constant 1.000000e+00 : f32
    %6 = vector.broadcast %cst_1 : f32 to vector<1x256xf32>
    %7 = arith.subf %6, %5 : vector<1x256xf32>
    %c0_2 = arith.constant 0 : index
    %c0_3 = arith.constant 0 : index
    %8 = vector.load %arg2[%c0_2, %c0_3] : memref<2x256xf32, #tpu.memory_space<vmem>>, vector<2x256xf32>
    %9 = vector.broadcast %7 : vector<1x256xf32> to vector<2x256xf32>
    %10 = arith.cmpf ogt, %8, %9 : vector<2x256xf32>
    %11 = arith.extui %10 : vector<2x256xi1> to vector<2x256xi32>
    %12 = arith.sitofp %11 : vector<2x256xi32> to vector<2x256xf32>
    %c0_4 = arith.constant 0 : index
    %c0_5 = arith.constant 0 : index
    %13 = vector.load %arg3[%c0_4, %c0_5] : memref<2x256xf32, #tpu.memory_space<vmem>>, vector<2x256xf32>
    tpu.vector_store %arg3[%c0_4, %c0_5], %12 {strides = array<i32>} : memref<2x256xf32, #tpu.memory_space<vmem>>, vector<2x256xf32>,
    return
  }
  func.func @transform_0(%arg0: i32) -> (i32, i32) {
    %c0_i32 = arith.constant 0 : i32
    %c0_i32_0 = arith.constant 0 : i32
    %c0_i32_1 = arith.constant 0 : i32
    return %c0_i32, %c0_i32_0 : i32, i32
  }
  func.func @transform_1(%arg0: i32) -> (i32, i32) {
    %c0_i32 = arith.constant 0 : i32
    %c0_i32_0 = arith.constant 0 : i32
    return %arg0, %c0_i32 : i32, i32
  }
  func.func @transform_2(%arg0: i32) -> (i32, i32) {
    %c0_i32 = arith.constant 0 : i32
    %c0_i32_0 = arith.constant 0 : i32
    return %arg0, %c0_i32 : i32, i32
  }
}

</mosaic_0001>

<llo_original>
// kernel: gumbel_adjacency_forward.1
$region0: #{gumbel_adjacency_forward.1}
  #allocation0 [shape = 'u32[]', space=smem, size = 0x4, offset = 0x4, fixed_abs, tag = 'smem constant byte address 0x4 - core index']
  #allocation1 [shape = 'u32[144,128]{1,0:T(1,128)}', space=vmem, size = 0x12000, scoped, tag = 'internal scratch']
  %s0 = inlined_call_operand.vmem [shape: f32[1,256], index: 0, kind: input, shape index: {}]
  %s1 = inlined_call_operand.vmem [shape: f32[2,256], index: 1, kind: input, shape index: {}]
  %s2 = inlined_call_operand.vmem [shape: f32[2,256], index: 2, kind: output, shape index: {}]
  %s3 = sld [smem:[#allocation0]]
  $region18: #{gumbel_adjacency_forward.1} parent=0
    _
  %s5 = ssub.s32 1, %s3
  %s6 = scalar_select 0, %s5, %s3
  // Predicated region
  $region2: #{gumbel_adjacency_forward.1} parent=0 // pred_check
    _
  $region3: #{gumbel_adjacency_forward.1} parent=0 // pred_check_branch
    %8 = sbr.rel (0) target = $region5
  $region4: #{gumbel_adjacency_forward.1} parent=0 // pred_region
    _
  $region5: #{gumbel_adjacency_forward.1} parent=0 // pred_fallthru
    _
  // Predicated region
  $region6: #{gumbel_adjacency_forward.1} parent=0 // pred_check
    _
  $region7: #{gumbel_adjacency_forward.1} parent=0 // pred_check_branch
    %10 = sbr.rel (0) target = $region9
  $region8: #{gumbel_adjacency_forward.1} parent=0 // pred_region
    _
  $region9: #{gumbel_adjacency_forward.1} parent=0 // pred_fallthru
    _
  %v11 = vld [vmem:[%s0] sm:$0x3]
  %v12 = vxor.u32 %v11, 2147483648
  %v13 = vmul.f32 %v12, 1.442695
  %v14 = vpow.pop %v13
  %v15 = vadd.f32 %v14, 1.0
  %v16 = vrcp.pop %v15
  %v17 = vmul.f32 1.0, %v16
  %v18 = vsub.f32 1.0, %v17
  %v19 = vld [vmem:[%s1] sm:$0xf]
  %v21 = vlaneseq
  %v22 = vshrl.u32 %v21, 7
  %v23 = vsub.s32 0, %v22
  %v24 = vrot.slane %v18, %v23
  %v25 = vlaneseq
  %v26 = vshrl.u32 %v25, 7
  %v27 = vsub.s32 1, %v26
  %v28 = vrot.slane %v18, %v27
  %v29 = vcombine.low %v24, %v28
  %v31 = vunpack.c.l.s4 1983009808
  %v32 = vunpack.c.0.s8 %v31
  %v33 = vlaneseq
  %v34 = vshrl.u32 %v33, 7
  %v35 = vsub.s32 %v32, %v34
  %v36 = vrot.slane %v29, %v35
  %vm38 = vcmp.gt.f32.partialorder %v19, %v36
  %v39 = vsel %vm38, 1, 0
  %v40 = vcvt.s32.f32 %v39
  %41 = vst [vmem:[%s2] sm:$0xf] %v40
  // Predicated region
  $region10: #{gumbel_adjacency_forward.1} parent=0 // pred_check
    _
  $region11: #{gumbel_adjacency_forward.1} parent=0 // pred_check_branch
    %43 = sbr.rel (0) target = $region13
  $region12: #{gumbel_adjacency_forward.1} parent=0 // pred_region
    _
  $region13: #{gumbel_adjacency_forward.1} parent=0 // pred_fallthru
    _
  // Predicated region
  $region14: #{gumbel_adjacency_forward.1} parent=0 // pred_check
    _
  $region15: #{gumbel_adjacency_forward.1} parent=0 // pred_check_branch
    %45 = sbr.rel (0) target = $region17
  $region16: #{gumbel_adjacency_forward.1} parent=0 // pred_region
    _
  $region17: #{gumbel_adjacency_forward.1} parent=0 // pred_fallthru
    _

</llo_original>
